<compile_context>
chip_gen: v5e
topology: v5e:2x2
jax: 0.10.0
libtpu: 0.0.40
codegen_flags: <defaults>
</compile_context>

<pallas_src>
import functools

import jax
import jax.numpy as jnp
from jax import lax
from jax.experimental import pallas as pl
from jax.experimental.pallas import tpu as pltpu


def _mask_final_layer_kernel(x_ref, w_ref, b_ref, o_ref, *, mxu_dtype):
    # x_ref: (1, TN, H)  token tile of the current batch element
    # w_ref: (1, H, D)   per-batch modulated weight  (1+scale) * W_lin
    # b_ref: (1, 1, D)   per-batch fused bias        shift @ W_lin + b_lin   (f32)
    # o_ref: (1, TN, D)
    x = x_ref[0].astype(jnp.float32)                      # (TN, H), f32 LN math
    h = x.shape[-1]
    inv_h = 1.0 / h

    # --- LayerNorm (eps=1e-6, no affine): two-pass stats for numerical stability.
    mean = jnp.sum(x, axis=-1, keepdims=True) * inv_h     # (TN, 1)
    d = x - mean
    var = jnp.sum(d * d, axis=-1, keepdims=True) * inv_h  # (TN, 1)
    xn = d * lax.rsqrt(var + 1e-6)                        # EUP rsqrt

    # --- Modulation is pre-folded into w_ref / b_ref; just project on the MXU.
    out = jnp.dot(xn.astype(mxu_dtype), w_ref[0].astype(mxu_dtype),
                  preferred_element_type=jnp.float32) + b_ref[0]
    # TODO(synk): for D < 128 a lane-dense repack (fold 128//D tokens into the lane
    # dim) would turn the masked vst into a full-width store; output traffic is only
    # ~D/H of the input read, so it is skipped for lowering simplicity.
    o_ref[0] = out.astype(o_ref.dtype)


def _vmem_capacity_bytes():
    try:
        return int(pltpu.get_tpu_info().vmem_capacity_bytes)
    except Exception:
        return 64 << 20  # conservative (v7x-sized) default


def _pick_token_tile(n, h, d, itemsize, budget_bytes, batch=1, min_programs=2):
    """Largest token tile TN such that (a) TN divides N, (b) TN is a multiple of 8
    or equals N (the (8,128) layout rule for the second-minor block dim), (c) the
    double-buffered x / out tiles fit the scoped-VMEM budget, and — when possible —
    (d) the grid has at least `min_programs` programs (v7x megacore occupancy)."""
    def fp(tn):
        return 2 * tn * h * itemsize + 2 * tn * max(d, 128) * itemsize

    cands = sorted({t for t in range(8, min(n, 8192) + 1, 8) if n % t == 0} | {n},
                   reverse=True)
    for t in cands:                       # budget + megacore occupancy
        if fp(t) <= budget_bytes and batch * (n // t) >= min_programs:
            return t
    for t in cands:                       # budget only
        if fp(t) <= budget_bytes:
            return t
    # Nothing fits the budget (pathological N with no small divisor): smallest legal
    # tile; the vmem_limit clamp in the caller still bounds usage.
    # TODO(synk): a pl.cdiv grid + @pl.when tail masking would handle this exactly.
    return cands[-1]


def mask_final_layer(x, t, w_ada, b_ada, w_lin, b_lin):
    """x: (B, N, H), t: (B, C), w_ada: (C, 2H), b_ada: (2H,),
    w_lin: (H, D), b_lin: (D,).  Returns (B, N, D) in x.dtype."""
    B, N, H = x.shape
    D = w_lin.shape[1]
    x_it = jnp.dtype(x.dtype).itemsize

    # bf16 MXU operands when the model runs in reduced precision; f32 otherwise.
    mxu_dtype = jnp.bfloat16 if x.dtype in (jnp.bfloat16, jnp.float16) else jnp.float32
    w_it = jnp.dtype(mxu_dtype).itemsize

    # --- adaLN modulation hoisted out of the kernel and folded into the projection:
    #       mod @ W + b  ==  ((x-mean)*inv_std) @ ((1+scale)*W)  +  (shift @ W + b)
    w_lin_f32 = w_lin.astype(jnp.float32)
    ada = jax.nn.silu(t.astype(jnp.float32)) @ w_ada.astype(jnp.float32)
    ada = ada + b_ada.astype(jnp.float32)                               # (B, 2H)
    shift, scale = ada[:, :H], ada[:, H:]
    w_mod = ((1.0 + scale)[:, :, None] * w_lin_f32[None]).astype(mxu_dtype)   # (B,H,D)
    b_mod = (shift @ w_lin_f32 + b_lin.astype(jnp.float32)).reshape(B, 1, D)  # (B,1,D) f32

    # --- per-generation VMEM budgets (v7x: 64 MiB/TC, v5e/v6e: 128 MiB).
    cap = _vmem_capacity_bytes()
    if cap >= (96 << 20):
        tile_budget = 48 << 20               # exploit the 128 MiB parts (v5e / v6e)
        vmem_cap = min(cap - (24 << 20), 100 << 20)
    else:
        tile_budget = 24 << 20               # stay well under the 64 MiB v7x ceiling
        vmem_cap = 56 << 20

    TN = _pick_token_tile(N, H, D, x_it, tile_budget, batch=B, min_programs=2)
    grid = (B, N // TN)

    fp = (2 * TN * H * x_it + 2 * TN * max(D, 128) * x_it      # x / out double-buffered
          + 2 * H * max(D, 128) * w_it                          # per-batch weight
          + 2 * max(D, 128) * 4)                                # per-batch bias
    vmem_limit = int(min(max(4 * fp, 32 << 20), vmem_cap))

    cost = pl.CostEstimate(
        flops=2 * B * N * H * D + 7 * B * N * H,
        transcendentals=B * N,
        bytes_accessed=(B * N * H * x_it          # x read
                        + B * N * D * x_it        # out write
                        + B * H * D * w_it        # modulated weights
                        + B * D * 4))             # fused bias

    kernel = functools.partial(_mask_final_layer_kernel, mxu_dtype=mxu_dtype)

    return pl.pallas_call(
        kernel,
        out_shape=jax.ShapeDtypeStruct((B, N, D), x.dtype),
        grid_spec=pltpu.PrefetchScalarGridSpec(
            num_scalar_prefetch=0,
            grid=grid,
            in_specs=[
                pl.BlockSpec((1, TN, H), lambda b, n: (b, n, 0)),   # x token tile
                # TODO(synk): pipeline_mode=pl.Buffered(1) on the two per-batch
                # constants would drop their second VMEM buffer (~H*D bytes); left
                # default-buffered for lowering robustness.
                pl.BlockSpec((1, H, D), lambda b, n: (b, 0, 0)),    # (1+scale) * W
                pl.BlockSpec((1, 1, D), lambda b, n: (b, 0, 0)),    # shift @ W + b
            ],
            out_specs=pl.BlockSpec((1, TN, D), lambda b, n: (b, n, 0)),
        ),
        compiler_params=pltpu.CompilerParams(
            dimension_semantics=("parallel", "parallel"),
            vmem_limit_bytes=vmem_limit),
        cost_estimate=cost,
    )(x, w_mod, b_mod)


def reference(x, t, w_ada, b_ada, w_lin, b_lin):
    silu = t * jax.nn.sigmoid(t)
    ada = silu @ w_ada + b_ada
    H = x.shape[-1]
    shift, scale = ada[:, :H], ada[:, H:]
    mean = jnp.mean(x, axis=-1, keepdims=True)
    var = jnp.mean((x - mean) ** 2, axis=-1, keepdims=True)
    xn = (x - mean) / jnp.sqrt(var + 1e-6)
    mod = xn * (1 + scale[:, None, :]) + shift[:, None, :]
    return mod @ w_lin + b_lin


if __name__ == "__main__":
    # Module config (small, consistent with MaskFinalLayer.__init__)
    final_hidden_size = 32
    c_emb_size = 32
    patch_size = 2
    out_channels = 4
    D = patch_size * patch_size * out_channels   # 16

    B, N = 2, 8

    key = jax.random.PRNGKey(0)
    kx, kt, k1, k2, k3, k4 = jax.random.split(key, 6)

    x = jax.random.normal(kx, (B, N, final_hidden_size), dtype=jnp.float32)
    t = jax.random.normal(kt, (B, c_emb_size), dtype=jnp.float32)

    # Deterministic synthetic parameters (stored as (in, out) so kernel does x @ W)
    w_ada = 0.05 * jax.random.normal(k1, (c_emb_size, 2 * final_hidden_size), jnp.float32)
    b_ada = 0.05 * jax.random.normal(k2, (2 * final_hidden_size,), jnp.float32)
    w_lin = 0.05 * jax.random.normal(k3, (final_hidden_size, D), jnp.float32)
    b_lin = 0.05 * jax.random.normal(k4, (D,), jnp.float32)

    fn = jax.jit(mask_final_layer)
    out = jax.block_until_ready(fn(x, t, w_ada, b_ada, w_lin, b_lin))

    ref = reference(x, t, w_ada, b_ada, w_lin, b_lin)
    assert out.shape == (B, N, D)
    assert jnp.allclose(out, ref, atol=1e-4, rtol=1e-4), "mismatch vs reference"

    print("KERNEL_OK")
</pallas_src>

<mosaic_0001>
module attributes {stable_mosaic.version = 11 : i64} {
  func.func @_mask_final_layer_kernel(%arg0: i32, %arg1: i32, %arg2: memref<1x8x32xf32, #tpu.memory_space<vmem>>, %arg3: memref<1x32x16xf32, #tpu.memory_space<vmem>>, %arg4: memref<1x1x16xf32, #tpu.memory_space<vmem>>, %arg5: memref<1x8x16xf32, #tpu.memory_space<vmem>>) attributes {dimension_semantics = [#tpu.dimension_semantics<parallel>, #tpu.dimension_semantics<parallel>], iteration_bounds = array<i64: 2, 1>, scalar_prefetch = 0 : i64, scratch_operands = 0 : i64, tpu.core_type = #tpu.core_type<tc>, window_params = [{transform_indices = @transform_0, window_bounds = array<i64: 1, 8, 32>}, {transform_indices = @transform_1, window_bounds = array<i64: 1, 32, 16>}, {transform_indices = @transform_2, window_bounds = array<i64: 1, 1, 16>}, {transform_indices = @transform_3, window_bounds = array<i64: 1, 8, 16>}]} {
    %c0 = arith.constant 0 : index
    %c0_0 = arith.constant 0 : index
    %c0_1 = arith.constant 0 : index
    %0 = vector.load %arg2[%c0, %c0_0, %c0_1] : memref<1x8x32xf32, #tpu.memory_space<vmem>>, vector<1x8x32xf32>
    %1 = vector.shape_cast %0 : vector<1x8x32xf32> to vector<8x32xf32>
    %cst = arith.constant dense<0.000000e+00> : vector<8xf32>
    %2 = vector.multi_reduction <add>, %1, %cst [1] : vector<8x32xf32> to vector<8xf32>
    %3 = vector.shape_cast %2 : vector<8xf32> to vector<8x1xf32>
    %cst_2 = arith.constant 3.125000e-02 : f32
    %4 = vector.broadcast %cst_2 : f32 to vector<8x1xf32>
    %5 = arith.mulf %3, %4 : vector<8x1xf32>
    %6 = vector.broadcast %5 : vector<8x1xf32> to vector<8x32xf32>
    %7 = arith.subf %1, %6 : vector<8x32xf32>
    %8 = arith.mulf %7, %7 : vector<8x32xf32>
    %cst_3 = arith.constant dense<0.000000e+00> : vector<8xf32>
    %9 = vector.multi_reduction <add>, %8, %cst_3 [1] : vector<8x32xf32> to vector<8xf32>
    %10 = vector.shape_cast %9 : vector<8xf32> to vector<8x1xf32>
    %cst_4 = arith.constant 3.125000e-02 : f32
    %11 = vector.broadcast %cst_4 : f32 to vector<8x1xf32>
    %12 = arith.mulf %10, %11 : vector<8x1xf32>
    %cst_5 = arith.constant 9.99999997E-7 : f32
    %13 = vector.broadcast %cst_5 : f32 to vector<8x1xf32>
    %14 = arith.addf %12, %13 : vector<8x1xf32>
    %15 = math.rsqrt %14 : vector<8x1xf32>
    %16 = vector.broadcast %15 : vector<8x1xf32> to vector<8x32xf32>
    %17 = arith.mulf %7, %16 : vector<8x32xf32>
    %c0_6 = arith.constant 0 : index
    %c0_7 = arith.constant 0 : index
    %c0_8 = arith.constant 0 : index
    %18 = vector.load %arg3[%c0_6, %c0_7, %c0_8] : memref<1x32x16xf32, #tpu.memory_space<vmem>>, vector<1x32x16xf32>
    %19 = vector.shape_cast %18 : vector<1x32x16xf32> to vector<32x16xf32>
    %cst_9 = arith.constant dense<0.000000e+00> : vector<8x16xf32>
    %20 = tpu.matmul %17, %19, %cst_9 {dimension_numbers = #tpu.dot_dimension_numbers<[1], [0], [0], [1], [0, 0, 1, 1], [], []>} : vector<8x32xf32>, vector<32x16xf32>, vector<8x16xf32> -> vector<8x16xf32>
    %c0_10 = arith.constant 0 : index
    %c0_11 = arith.constant 0 : index
    %c0_12 = arith.constant 0 : index
    %21 = vector.load %arg4[%c0_10, %c0_11, %c0_12] : memref<1x1x16xf32, #tpu.memory_space<vmem>>, vector<1x1x16xf32>
    %22 = vector.shape_cast %21 : vector<1x1x16xf32> to vector<1x16xf32>
    %23 = vector.broadcast %22 : vector<1x16xf32> to vector<8x16xf32>
    %24 = arith.addf %20, %23 : vector<8x16xf32>
    %c0_13 = arith.constant 0 : index
    %c0_14 = arith.constant 0 : index
    %c0_15 = arith.constant 0 : index
    %25 = vector.load %arg5[%c0_13, %c0_14, %c0_15] : memref<1x8x16xf32, #tpu.memory_space<vmem>>, vector<1x8x16xf32>
    %26 = vector.shape_cast %25 : vector<1x8x16xf32> to vector<8x16xf32>
    %27 = vector.shape_cast %24 : vector<8x16xf32> to vector<1x8x16xf32>
    tpu.vector_store %arg5[%c0_13, %c0_14, %c0_15], %27 {strides = array<i32>} : memref<1x8x16xf32, #tpu.memory_space<vmem>>, vector<1x8x16xf32>,
    return
  }
  func.func @transform_0(%arg0: i32, %arg1: i32) -> (i32, i32, i32) {
    %c0_i32 = arith.constant 0 : i32
    %c0_i32_0 = arith.constant 0 : i32
    return %arg0, %arg1, %c0_i32 : i32, i32, i32
  }
  func.func @transform_1(%arg0: i32, %arg1: i32) -> (i32, i32, i32) {
    %c0_i32 = arith.constant 0 : i32
    %c0_i32_0 = arith.constant 0 : i32
    %c0_i32_1 = arith.constant 0 : i32
    return %arg0, %c0_i32, %c0_i32_0 : i32, i32, i32
  }
  func.func @transform_2(%arg0: i32, %arg1: i32) -> (i32, i32, i32) {
    %c0_i32 = arith.constant 0 : i32
    %c0_i32_0 = arith.constant 0 : i32
    %c0_i32_1 = arith.constant 0 : i32
    return %arg0, %c0_i32, %c0_i32_0 : i32, i32, i32
  }
  func.func @transform_3(%arg0: i32, %arg1: i32) -> (i32, i32, i32) {
    %c0_i32 = arith.constant 0 : i32
    %c0_i32_0 = arith.constant 0 : i32
    return %arg0, %arg1, %c0_i32 : i32, i32, i32
  }
}

</mosaic_0001>

<llo_original>
// kernel: mask_final_layer.1
$region0: #{mask_final_layer.1}
  #allocation0 [shape = 'u32[]', space=smem, size = 0x4, offset = 0x4, fixed_abs, tag = 'smem constant byte address 0x4 - core index']
  #allocation1 [shape = 'u32[72,128]{1,0:T(1,128)}', space=vmem, size = 0x9000, scoped, tag = 'internal scratch']
  %s0 = inlined_call_operand.vmem [shape: f32[2,8,32], index: 0, kind: input, shape index: {}]
  %s1 = inlined_call_operand.vmem [shape: f32[2,32,16], index: 1, kind: input, shape index: {}]
  %s2 = inlined_call_operand.vmem [shape: f32[2,1,16], index: 2, kind: input, shape index: {}]
  %s3 = inlined_call_operand.hbm [shape: f32[2,8,16], index: 3, kind: output, shape index: {}]
  %s4 = sld [smem:[#allocation0]]
  $region45: #{mask_final_layer.1} parent=0
    _
  %s6 = ssub.s32 1, %s4
  %s7 = scalar_select 0, %s6, %s4
  $region1: #{mask_final_layer.1} parent=0
    #allocation2 [shape = 'u8[8192]{0}', space=vmem, size = 0x2000, scoped, tag = 'output window, operand 0']
    #allocation3 [shape = 's32[2]{0}', space=sflag, size = 0x8, scoped, tag = 'scoped memory for mask_final_layer.1']
    %8 = vsyncpa [#allocation3], 0
    %s9 = scalar_lea.sflag [#allocation3], 1
    %10 = vsyncpa %s9, 0
    loop: start=0, step=1, limit=4
    $region2: #{mask_final_layer.1} parent=1 // loop_pre_header
      _
    $region3: #{mask_final_layer.1} parent=1 // loop_header
      %s12 = sphi 0, %s16
      %p13 = scmp.ge.s32.totalorder %s12, 4
      %s19 = sphi 0, %s31
      %s20 = sphi 0, %s27
      %s21 = sphi 0, %s19
      %s22 = sphi 0, %s20
      %s23 = sphi 0, %s21
      %s24 = sphi 0, %s22
      %s36 = sphi 0, %s38
      %s39 = sphi 0, %s36
      %s40 = sphi 0, %s39
      %s56 = sphi 0, %s40
      %s62 = sphi 0, %s64
      %s65 = sphi 0, %s62
      %s66 = sphi 0, %s65
      %s82 = sphi 0, %s66
      %s88 = sphi 0, %s90
      %s91 = sphi 0, %s88
      %s92 = sphi 0, %s91
      %s108 = sphi 0, %s92
      %s116 = sphi 0, %s118
      %s119 = sphi 0, %s116
      %s120 = sphi 0, %s119
      %s136 = sphi 0, %s120
    $region4: #{mask_final_layer.1} parent=1 // loop_header_branch
      %15 = sbr.rel (%p13) target = $region8
    $region5: #{mask_final_layer.1} parent=1 // loop_body
      %s17 = ssub.s32 %s12, 1
      %s18 = ssub.s32 %s12, 2
      %s25 = sadd.s32 1, %s20
      %p26 = scmp.ge.s32.totalorder %s25, 1
      %s27 = scalar_select %p26, 0, %s25
      %s28 = sadd.s32 1, %s19
      %s29 = scalar_select %p26, %s28, %s19
      %p30 = scmp.ge.s32.totalorder %s29, 2
      %s31 = scalar_select %p30, 0, %s29
      %s32 = ssub.s32 %s19, %s31
      %s33 = ssub.s32 %s20, %s27
      %s34 = sor.u32 %s32, %s33
      %p35 = scmp.eq.s32.totalorder %s34, 0
      %s37 = sadd.s32 %s36, 1
      %s38 = scalar_select %p35, %s36, %s37
      %p41 = pneg %p35
      %p42 = scmp.eq.s32.totalorder %s12, 1
      %p43 = por %p41, %p42
      %p44 = scmp.ne.s32.totalorder %s36, %s39
      %p45 = scmp.eq.s32.totalorder %s12, 0
      %p46 = por %p44, %p45
      %p47 = scmp.ne.s32.totalorder %s36, %s39
      %p48 = scmp.eq.s32.totalorder %s17, 1
      %p49 = por %p47, %p48
      %p50 = scmp.ne.s32.totalorder %s39, %s40
      %p51 = scmp.eq.s32.totalorder %s17, 0
      %p52 = por %p50, %p51
      %p53 = scmp.ne.s32.totalorder %s39, %s40
      %p54 = scmp.eq.s32.totalorder %s18, 1
      %p55 = por %p53, %p54
      %p57 = scmp.ne.s32.totalorder %s40, %s56
      %p58 = scmp.eq.s32.totalorder %s18, 0
      %p59 = por %p57, %p58
      %s60 = ssub.s32 %s19, %s31
      %p61 = scmp.eq.s32.totalorder %s60, 0
      %s63 = sadd.s32 %s62, 1
      %s64 = scalar_select %p61, %s62, %s63
      %p67 = pneg %p61
      %p68 = scmp.eq.s32.totalorder %s12, 1
      %p69 = por %p67, %p68
      %p70 = scmp.ne.s32.totalorder %s62, %s65
      %p71 = scmp.eq.s32.totalorder %s12, 0
      %p72 = por %p70, %p71
      %p73 = scmp.ne.s32.totalorder %s62, %s65
      %p74 = scmp.eq.s32.totalorder %s17, 1
      %p75 = por %p73, %p74
      %p76 = scmp.ne.s32.totalorder %s65, %s66
      %p77 = scmp.eq.s32.totalorder %s17, 0
      %p78 = por %p76, %p77
      %p79 = scmp.ne.s32.totalorder %s65, %s66
      %p80 = scmp.eq.s32.totalorder %s18, 1
      %p81 = por %p79, %p80
      %p83 = scmp.ne.s32.totalorder %s66, %s82
      %p84 = scmp.eq.s32.totalorder %s18, 0
      %p85 = por %p83, %p84
      %s86 = ssub.s32 %s19, %s31
      %p87 = scmp.eq.s32.totalorder %s86, 0
      %s89 = sadd.s32 %s88, 1
      %s90 = scalar_select %p87, %s88, %s89
      %p93 = pneg %p87
      %p94 = scmp.eq.s32.totalorder %s12, 1
      %p95 = por %p93, %p94
      %p96 = scmp.ne.s32.totalorder %s88, %s91
      %p97 = scmp.eq.s32.totalorder %s12, 0
      %p98 = por %p96, %p97
      %p99 = scmp.ne.s32.totalorder %s88, %s91
      %p100 = scmp.eq.s32.totalorder %s17, 1
      %p101 = por %p99, %p100
      %p102 = scmp.ne.s32.totalorder %s91, %s92
      %p103 = scmp.eq.s32.totalorder %s17, 0
      %p104 = por %p102, %p103
      %p105 = scmp.ne.s32.totalorder %s91, %s92
      %p106 = scmp.eq.s32.totalorder %s18, 1
      %p107 = por %p105, %p106
      %p109 = scmp.ne.s32.totalorder %s92, %s108
      %p110 = scmp.eq.s32.totalorder %s18, 0
      %p111 = por %p109, %p110
      %s112 = ssub.s32 %s19, %s31
      %s113 = ssub.s32 %s20, %s27
      %s114 = sor.u32 %s112, %s113
      %p115 = scmp.eq.s32.totalorder %s114, 0
      %s117 = sadd.s32 %s116, 1
      %s118 = scalar_select %p115, %s116, %s117
      %p121 = pneg %p115
      %p122 = scmp.eq.s32.totalorder %s12, 1
      %p123 = por %p121, %p122
      %p124 = scmp.ne.s32.totalorder %s116, %s119
      %p125 = scmp.eq.s32.totalorder %s12, 0
      %p126 = por %p124, %p125
      %p127 = scmp.ne.s32.totalorder %s116, %s119
      %p128 = scmp.eq.s32.totalorder %s17, 1
      %p129 = por %p127, %p128
      %p130 = scmp.ne.s32.totalorder %s119, %s120
      %p131 = scmp.eq.s32.totalorder %s17, 0
      %p132 = por %p130, %p131
      %p133 = scmp.ne.s32.totalorder %s119, %s120
      %p134 = scmp.eq.s32.totalorder %s18, 1
      %p135 = por %p133, %p134
      %p137 = scmp.ne.s32.totalorder %s120, %s136
      %p138 = scmp.eq.s32.totalorder %s18, 0
      %p139 = por %p137, %p138
      %p140 = scmp.le.s32.totalorder 1, %s12
      %p141 = scmp.lt.s32.totalorder %s12, 3
      %p142 = pnand %p140, %p141
      %p143 = pneg %p142
      // Predicated region
      $region9: #{mask_final_layer.1} parent=5 // pred_check
        _
      $region10: #{mask_final_layer.1} parent=5 // pred_check_branch
        %145 = sbr.rel (%p142) target = $region12
      $region11: #{mask_final_layer.1} parent=5 // pred_region
        %s146 = ssub.s32 %s12, 1
      $region12: #{mask_final_layer.1} parent=5 // pred_fallthru
        _
      %p147 = scmp.lt.s32.totalorder %s12, 2
      // Predicated region
      $region13: #{mask_final_layer.1} parent=5 // pred_check
        %p148 = pneg %p147
      $region14: #{mask_final_layer.1} parent=5 // pred_check_branch
        %150 = sbr.rel (%p148) target = $region16
      $region15: #{mask_final_layer.1} parent=5 // pred_region
        // Predicated region
        $region17: #{mask_final_layer.1} parent=15 // pred_check
          %p151 = pneg %p46
        $region18: #{mask_final_layer.1} parent=15 // pred_check_branch
          %153 = sbr.rel (%p151) target = $region20
        $region19: #{mask_final_layer.1} parent=15 // pred_region
          %p154 = scmp.lt.s32.totalorder %s19, 1
          %s155 = scalar_select %p154, %s19, 1
          %p156 = scmp.lt.s32.totalorder %s20, 0
          %s157 = scalar_select %p156, %s20, 0
          %s158 = sadd.s32 %s157, %s155
          %s159 = smul.addr %s158, 8
          %s160 = scalar_lea.vmem %s0, %s159
        $region20: #{mask_final_layer.1} parent=15 // pred_fallthru
          _
        // Predicated region
        $region21: #{mask_final_layer.1} parent=15 // pred_check
          %p161 = pneg %p72
        $region22: #{mask_final_layer.1} parent=15 // pred_check_branch
          %163 = sbr.rel (%p161) target = $region24
        $region23: #{mask_final_layer.1} parent=15 // pred_region
          %p164 = scmp.lt.s32.totalorder %s19, 1
          %s165 = scalar_select %p164, %s19, 1
          %s166 = smul.addr %s165, 4
          %s167 = smul.addr %s166, 8
          %s168 = scalar_lea.vmem %s1, %s167
        $region24: #{mask_final_layer.1} parent=15 // pred_fallthru
          _
        // Predicated region
        $region25: #{mask_final_layer.1} parent=15 // pred_check
          %p169 = pneg %p98
        $region26: #{mask_final_layer.1} parent=15 // pred_check_branch
          %171 = sbr.rel (%p169) target = $region28
        $region27: #{mask_final_layer.1} parent=15 // pred_region
          %p172 = scmp.lt.s32.totalorder %s19, 1
          %s173 = scalar_select %p172, %s19, 1
          %s174 = scalar_lea.vmem %s2, %s173
        $region28: #{mask_final_layer.1} parent=15 // pred_fallthru
          _
      $region16: #{mask_final_layer.1} parent=5 // pred_fallthru
        _
      %p175 = scmp.le.s32.totalorder 1, %s12
      %p176 = scmp.lt.s32.totalorder %s12, 3
      %p177 = pnand %p175, %p176
      %p178 = pneg %p177
      // Predicated region
      $region29: #{mask_final_layer.1} parent=5 // pred_check
        _
      $region30: #{mask_final_layer.1} parent=5 // pred_check_branch
        %180 = sbr.rel (%p177) target = $region32
      $region31: #{mask_final_layer.1} parent=5 // pred_region
        %s181 = ssub.s32 %s12, 1
        %p182 = scmp.lt.s32.totalorder %s21, 1
        %s183 = scalar_select %p182, %s21, 1
        %p184 = scmp.lt.s32.totalorder %s22, 0
        %s185 = scalar_select %p184, %s22, 0
        %s186 = sadd.s32 %s185, %s183
        %s187 = smul.addr %s186, 8
        %s188 = scalar_lea.vmem %s0, %s187
        %p189 = pneg %p52
        %p190 = pneg %p49
        %p191 = scmp.lt.s32.totalorder %s21, 1
        %s192 = scalar_select %p191, %s21, 1
        %s193 = smul.addr %s192, 4
        %s194 = smul.addr %s193, 8
        %s195 = scalar_lea.vmem %s1, %s194
        %p196 = pneg %p78
        %p197 = pneg %p75
        %p198 = scmp.lt.s32.totalorder %s21, 1
        %s199 = scalar_select %p198, %s21, 1
        %s200 = scalar_lea.vmem %s2, %s199
        %p201 = pneg %p104
        %p202 = pneg %p101
        %p203 = pneg %p132
        %p204 = pneg %p129
        %s205 = sand.u32 %s119, 1
        %s206 = scalar_lea.sflag [#allocation3], %s205
        %s207 = sand.u32 %s119, 1
        %s208 = smul.addr %s207, 8
        %s209 = scalar_lea.vmem [#allocation2], %s208
        %p210 = scmp.lt.s32.totalorder %s21, 1
        %s211 = scalar_select %p210, %s21, 1
        %p212 = scmp.lt.s32.totalorder %s22, 0
        %s213 = scalar_select %p212, %s22, 0
        %s214 = sadd.s32 %s213, %s211
        %s215 = smul.addr %s214, 8
        %s216 = scalar_lea.vmem %s0, %s215
        %p217 = scmp.lt.s32.totalorder %s21, 1
        %s218 = scalar_select %p217, %s21, 1
        %s219 = smul.addr %s218, 4
        %s220 = smul.addr %s219, 8
        %s221 = scalar_lea.vmem %s1, %s220
        %p222 = scmp.lt.s32.totalorder %s21, 1
        %s223 = scalar_select %p222, %s21, 1
        %s224 = scalar_lea.vmem %s2, %s223
        %v225 = vld [vmem:[%s216] sm:$0xff]
        %vm226 = vcmask 261120
        %v227 = vsel %vm226, %v225, 0.0
        %228 = vadd.xlane.f32.xlu0 %v227
        %v229 = vpop.xlane.xlu0 %228
        %v230 = vmul.f32 %v229, 0.03125
        %v231 = vsub.f32 %v225, %v230
        %v232 = vmul.f32 %v231, %v231
        %v233 = vsel %vm226, %v232, 0.0
        %234 = vadd.xlane.f32.xlu0 %v233
        %v235 = vpop.xlane.xlu0 %234
        %v236 = vmul.f32 %v235, 0.03125
        %v237 = vadd.f32 %v236, 1e-06
        %v238 = vrsqrt.pop %v237
        %v239 = vmul.f32 %v238, %v237
        %v240 = vmul.f32 %v239, %v238
        %v241 = vmul.f32 0.5, %v240
        %v242 = vsub.f32 1.5, %v241
        %v243 = vmul.f32 %v238, %v242
        %vm244 = vweird.f32 %v237
        %vm245 = vweird.f32 %v238
        %vm246 = vmor %vm244, %vm245
        %v247 = vsel %vm246, %v238, %v243
        %v248 = vmul.f32 %v231, %v247
        %v249 = vld [vmem:[%s221] sm:$0xff]
        %v250 = vld [vmem:[%s221 + $0x8] sm:$0xff]
        %v251 = vld [vmem:[%s221 + $0x10] sm:$0xff]
        %v252 = vld [vmem:[%s221 + $0x18] sm:$0xff]
        %v253 = vld [vmem:[%s224] sm:$0x1]
        %v255 = vperm.slane %v253, 0
        %v258 = vsel %vm226, %v248, 0
        %260 = vmatpush.msra.mxu0 0.0
        %261 = vmatpush.msra.mxu0 0.0
        %262 = vmatpush.msra.mxu0 0.0
        %263 = vmatpush.msra.mxu0 0.0
        %264 = vmatpush.msra.mxu0 0.0
        %265 = vmatpush.msra.mxu0 0.0
        %266 = vmatpush.msra.mxu0 0.0
        %267 = vmatpush.msra.mxu0 0.0
        %268 = vmatpush.msra.mxu0 0.0
        %269 = vmatpush.msra.mxu0 0.0
        %270 = vmatpush.msra.mxu0 0.0
        %271 = vmatpush.msra.mxu0 0.0
        %272 = vmatpush.msra.mxu0 %v252
        %273 = vmatpush.msra.mxu0 %v251
        %274 = vmatpush.msra.mxu0 %v250
        %275 = vmatpush.msra.mxu0 %v249
        %276 = vmatmul.f32.gmra.mxu0 %v258
        %v277 = vpop.f32.mrf.mxu0
        %v278 = vadd.f32 %v255, %v277
        %279 = vdwg.mxu0
        %vm280 = vcmask 130048
        %281 = vst.msk [vmem:[%s209] sm:$0xff] %vm280, %v278
        %s282 = sand.u32 %s119, 1
        %s283 = scalar_lea.sflag [#allocation3], %s282
        %s284 = sand.u32 %s119, 1
        %s285 = smul.addr %s284, 8
        %s286 = scalar_lea.vmem [#allocation2], %s285
        // Predicated region
        $region33: #{mask_final_layer.1} parent=31 // pred_check
          %p287 = pneg %p129
        $region34: #{mask_final_layer.1} parent=31 // pred_check_branch
          %289 = sbr.rel (%p287) target = $region36
        $region35: #{mask_final_layer.1} parent=31 // pred_region
          %291 = vsyncadd %s283, 0
          %s292 = sadd.s32 %s22, %s21
          %s293 = smul.addr %s292, 8
          %s294 = scalar_lea.hbm %s3, %s293
          %s296 = sshll.u32 %s286, 4
          %s297 = int_to_ptr.vmem [resolvable:$true] %s296
          %s298 = sshll.u32 %s294, 4
          %s299 = int_to_ptr.hbm [resolvable:$true] %s298
          %301 = dma.vmem_to_hbm [thread:$0]  %s297, 128, %s299, %s283
        $region36: #{mask_final_layer.1} parent=31 // pred_fallthru
          _
      $region32: #{mask_final_layer.1} parent=5 // pred_fallthru
        _
      %p302 = scmp.le.s32.totalorder 2, %s12
      // Predicated region
      $region37: #{mask_final_layer.1} parent=5 // pred_check
        %p303 = pneg %p302
      $region38: #{mask_final_layer.1} parent=5 // pred_check_branch
        %305 = sbr.rel (%p303) target = $region40
      $region39: #{mask_final_layer.1} parent=5 // pred_region
        %s306 = ssub.s32 %s12, 2
        // Predicated region
        $region41: #{mask_final_layer.1} parent=39 // pred_check
          %p307 = pneg %p135
        $region42: #{mask_final_layer.1} parent=39 // pred_check_branch
          %309 = sbr.rel (%p307) target = $region44
        $region43: #{mask_final_layer.1} parent=39 // pred_region
          %s310 = sand.u32 %s120, 1
          %s311 = scalar_lea.sflag [#allocation3], %s310
          %s312 = sand.u32 %s120, 1
          %s313 = smul.addr %s312, 8
          %s314 = scalar_lea.vmem [#allocation2], %s313
          %316 = dma.done %s311, 128
        $region44: #{mask_final_layer.1} parent=39 // pred_fallthru
          _
      $region40: #{mask_final_layer.1} parent=5 // pred_fallthru
        _
    $region6: #{mask_final_layer.1} parent=1 // loop_footer
      %s16 = sadd.s32 1, %s12
    $region7: #{mask_final_layer.1} parent=1 // loop_footer_branch
      %11 = sbr.rel target = $region3
    $region8: #{mask_final_layer.1} parent=1 // loop_exit
      _
    %317 = vsyncpa [#allocation3], 1
    %s318 = scalar_lea.sflag [#allocation3], 1
    %319 = vsyncpa %s318, 1

</llo_original>
